<compile_context>
chip_gen: v7x
topology: tpu7x:2x2x1
jax: 0.10.0
libtpu: 0.0.40
codegen_flags: <defaults>
</compile_context>

<pallas_src>
import functools

import jax
import jax.numpy as jnp
from jax.experimental import pallas as pl
from jax.experimental.pallas import tpu as pltpu

FRAMES = 5
IN_DIM = FRAMES * 2     # 10
HID = 128
OUT_DIM = 2

_ALIGN = 16             # batch-tile alignment: covers f32 (8) and bf16 (16) sublane tiling
_DEFAULT_TB = 512       # MXU-aligned batch tile (multiple of 256); far below VMEM limits
_MAX_TB = 4096          # keep double-buffered blocks + f32 intermediates under v7x's 64 MiB VMEM


def _round_up(n, m):
    return ((n + m - 1) // m) * m


def _mlp_kernel(x_ref,
                w1_ref, b1_ref,
                w2_ref, b2_ref,
                w3_ref, b3_ref,
                w4_ref, b4_ref,
                o_ref):
    """Fused 4-layer MLP forward for one batch tile.

    All four matmuls run on the MXU with bf16 inputs (2-3x MXU throughput vs
    f32 on v6e/v7x, halves weight/activation DMA bytes) and f32 accumulation;
    bias-add + ReLU run on the VPU in f32.
    """
    x = x_ref[...]                                                       # (tb, 10) bf16
    h = jnp.dot(x, w1_ref[...], preferred_element_type=jnp.float32)     # (tb, 128) f32
    h = jnp.maximum(h + b1_ref[...], 0.0)
    h = jnp.dot(h.astype(jnp.bfloat16), w2_ref[...],
                preferred_element_type=jnp.float32)
    h = jnp.maximum(h + b2_ref[...], 0.0)
    h = jnp.dot(h.astype(jnp.bfloat16), w3_ref[...],
                preferred_element_type=jnp.float32)
    h = jnp.maximum(h + b3_ref[...], 0.0)
    y = jnp.dot(h.astype(jnp.bfloat16), w4_ref[...],
                preferred_element_type=jnp.float32)                      # (tb, 2) f32
    o_ref[...] = (y + b4_ref[...]).astype(o_ref.dtype)


@functools.partial(jax.jit, static_argnames=("tb",))
def dqn_simple_forward(x, params, *, tb=_DEFAULT_TB):
    """Forward pass of DnqSimple. x: any shape reshapeable to (B, FRAMES*2)."""
    x = jnp.asarray(x, jnp.float32).reshape(-1, IN_DIM)   # torch: x.view(-1, FRAMES*2)
    B = x.shape[0]

    # Fixed, MXU-aligned batch tile (not tb=B): a multi-step grid lets BlockSpec
    # double-buffering overlap the (tb,10)/(tb,2) DMAs with compute and lets the
    # 'parallel' batch axis be sharded across both TensorCores on v7x.
    tb = max(_ALIGN, min(int(tb), _MAX_TB))
    tb = (tb // _ALIGN) * _ALIGN
    # Small batches: shrink the tile to the (aligned) batch so we don't pad to 512.
    tb_eff = _round_up(B, _ALIGN) if B <= tb else tb
    B_pad = _round_up(B, tb_eff)

    if B_pad != B:
        x = jnp.pad(x, ((0, B_pad - B), (0, 0)))          # zero-pad tail rows, sliced off below
    x_bf16 = x.astype(jnp.bfloat16)                       # halves the input DMA stream

    w1 = params["w1"].astype(jnp.bfloat16)
    w2 = params["w2"].astype(jnp.bfloat16)
    w3 = params["w3"].astype(jnp.bfloat16)
    w4 = params["w4"].astype(jnp.bfloat16)
    b1 = params["b1"].astype(jnp.float32)
    b2 = params["b2"].astype(jnp.float32)
    b3 = params["b3"].astype(jnp.float32)
    b4 = params["b4"].astype(jnp.float32)

    def const_spec(arr):
        # Weights/biases: one full-array block with a constant index_map, so the
        # ~67 KB of bf16 weights are DMA'd once and stay resident across the grid.
        return pl.BlockSpec(arr.shape, lambda i: (0, 0))

    grid = (B_pad // tb_eff,)
    out = pl.pallas_call(
        _mlp_kernel,
        out_shape=jax.ShapeDtypeStruct((B_pad, OUT_DIM), jnp.float32),
        grid_spec=pltpu.PrefetchScalarGridSpec(
            num_scalar_prefetch=0,
            grid=grid,
            in_specs=[
                pl.BlockSpec((tb_eff, IN_DIM), lambda i: (i, 0)),
                const_spec(w1), const_spec(b1),
                const_spec(w2), const_spec(b2),
                const_spec(w3), const_spec(b3),
                const_spec(w4), const_spec(b4),
            ],
            out_specs=pl.BlockSpec((tb_eff, OUT_DIM), lambda i: (i, 0)),
        ),
        compiler_params=pltpu.CompilerParams(
            # Batch tiles are independent -> megacore sharding on v7x.
            dimension_semantics=("parallel",)),
    )(x_bf16, w1, b1, w2, b2, w3, b3, w4, b4)

    return out[:B]


def init_params(key):
    """Matches DnqSimple.initialize_weights(): N(0, 0.01) weights, zero biases.

    Weights are stored as (in, out) — the transpose of torch's (out, in) Linear
    weight — and kept in bfloat16 (MXU input dtype). Biases are (1, out) f32.
    """
    k1, k2, k3, k4 = jax.random.split(key, 4)
    std = 0.01
    return {
        "w1": (jax.random.normal(k1, (IN_DIM, HID)) * std).astype(jnp.bfloat16),
        "b1": jnp.zeros((1, HID), jnp.float32),
        "w2": (jax.random.normal(k2, (HID, HID)) * std).astype(jnp.bfloat16),
        "b2": jnp.zeros((1, HID), jnp.float32),
        "w3": (jax.random.normal(k3, (HID, HID)) * std).astype(jnp.bfloat16),
        "b3": jnp.zeros((1, HID), jnp.float32),
        "w4": (jax.random.normal(k4, (HID, OUT_DIM)) * std).astype(jnp.bfloat16),
        "b4": jnp.zeros((1, OUT_DIM), jnp.float32),
    }


def _reference_forward(x, params):
    """Pure-JAX reference mirroring the kernel numerics (bf16 matmul, f32 acc)."""
    h = jnp.asarray(x, jnp.float32).reshape(-1, IN_DIM)

    def layer(h, w, b, relu=True):
        y = jnp.dot(h.astype(jnp.bfloat16), w.astype(jnp.bfloat16),
                    preferred_element_type=jnp.float32) + b.astype(jnp.float32)
        return jnp.maximum(y, 0.0) if relu else y

    h = layer(h, params["w1"], params["b1"])
    h = layer(h, params["w2"], params["b2"])
    h = layer(h, params["w3"], params["b3"])
    return layer(h, params["w4"], params["b4"], relu=False)


if __name__ == "__main__":
    key = jax.random.PRNGKey(0)
    pkey, xkey1, xkey2 = jax.random.split(key, 3)
    params = init_params(pkey)

    # Small demo batch: 8 stacked (FRAMES, 2) observations; the wrapper flattens
    # to (8, 10) exactly like torch's x.view(-1, FRAMES*2).
    x_small = jax.random.normal(xkey1, (8, FRAMES, 2), dtype=jnp.float32)
    out_small = jax.block_until_ready(dqn_simple_forward(x_small, params))
    ref_small = _reference_forward(x_small, params)
    assert out_small.shape == (8, OUT_DIM)
    assert jnp.allclose(out_small, ref_small, atol=1e-4, rtol=1e-2), \
        "mismatch vs JAX reference (small batch)"

    # Larger, non-tile-aligned batch exercises the multi-step 'parallel' grid
    # (DMA/compute pipelining, v7x megacore) and the tail-padding path.
    x_big = jax.random.normal(xkey2, (600, IN_DIM), dtype=jnp.float32)
    out_big = jax.block_until_ready(dqn_simple_forward(x_big, params))
    ref_big = _reference_forward(x_big, params)
    assert out_big.shape == (600, OUT_DIM)
    assert jnp.allclose(out_big, ref_big, atol=1e-4, rtol=1e-2), \
        "mismatch vs JAX reference (large batch)"

    print("KERNEL_OK")
</pallas_src>

<mosaic_0001>
module attributes {stable_mosaic.version = 11 : i64} {
  func.func @_mlp_kernel(%arg0: i32, %arg1: memref<16x10xbf16, #tpu.memory_space<vmem>>, %arg2: memref<10x128xbf16, #tpu.memory_space<vmem>>, %arg3: memref<1x128xf32, #tpu.memory_space<vmem>>, %arg4: memref<128x128xbf16, #tpu.memory_space<vmem>>, %arg5: memref<1x128xf32, #tpu.memory_space<vmem>>, %arg6: memref<128x128xbf16, #tpu.memory_space<vmem>>, %arg7: memref<1x128xf32, #tpu.memory_space<vmem>>, %arg8: memref<128x2xbf16, #tpu.memory_space<vmem>>, %arg9: memref<1x2xf32, #tpu.memory_space<vmem>>, %arg10: memref<16x2xf32, #tpu.memory_space<vmem>>) attributes {dimension_semantics = [#tpu.dimension_semantics<parallel>], iteration_bounds = array<i64: 1>, scalar_prefetch = 0 : i64, scratch_operands = 0 : i64, tpu.core_type = #tpu.core_type<tc>, window_params = [{transform_indices = @transform_0, window_bounds = array<i64: 16, 10>}, {pipeline_mode = #tpu.pipeline_mode<synchronous>, transform_indices = @transform_1, window_bounds = array<i64: 10, 128>}, {pipeline_mode = #tpu.pipeline_mode<synchronous>, transform_indices = @transform_2, window_bounds = array<i64: 1, 128>}, {pipeline_mode = #tpu.pipeline_mode<synchronous>, transform_indices = @transform_3, window_bounds = array<i64: 128, 128>}, {pipeline_mode = #tpu.pipeline_mode<synchronous>, transform_indices = @transform_4, window_bounds = array<i64: 1, 128>}, {pipeline_mode = #tpu.pipeline_mode<synchronous>, transform_indices = @transform_5, window_bounds = array<i64: 128, 128>}, {pipeline_mode = #tpu.pipeline_mode<synchronous>, transform_indices = @transform_6, window_bounds = array<i64: 1, 128>}, {pipeline_mode = #tpu.pipeline_mode<synchronous>, transform_indices = @transform_7, window_bounds = array<i64: 128, 2>}, {pipeline_mode = #tpu.pipeline_mode<synchronous>, transform_indices = @transform_8, window_bounds = array<i64: 1, 2>}, {transform_indices = @transform_9, window_bounds = array<i64: 16, 2>}]} {
    %c0 = arith.constant 0 : index
    %c0_0 = arith.constant 0 : index
    %0 = vector.load %arg1[%c0, %c0_0] : memref<16x10xbf16, #tpu.memory_space<vmem>>, vector<16x10xbf16>
    %c0_1 = arith.constant 0 : index
    %c0_2 = arith.constant 0 : index
    %1 = vector.load %arg2[%c0_1, %c0_2] : memref<10x128xbf16, #tpu.memory_space<vmem>>, vector<10x128xbf16>
    %cst = arith.constant dense<0.000000e+00> : vector<16x128xf32>
    %2 = tpu.matmul %0, %1, %cst {dimension_numbers = #tpu.dot_dimension_numbers<[1], [0], [0], [1], [0, 0, 1, 1], [], []>} : vector<16x10xbf16>, vector<10x128xbf16>, vector<16x128xf32> -> vector<16x128xf32>
    %c0_3 = arith.constant 0 : index
    %c0_4 = arith.constant 0 : index
    %3 = vector.load %arg3[%c0_3, %c0_4] : memref<1x128xf32, #tpu.memory_space<vmem>>, vector<1x128xf32>
    %4 = vector.broadcast %3 : vector<1x128xf32> to vector<16x128xf32>
    %5 = arith.addf %2, %4 : vector<16x128xf32>
    %cst_5 = arith.constant 0.000000e+00 : f32
    %6 = vector.broadcast %cst_5 : f32 to vector<16x128xf32>
    %7 = arith.maximumf %5, %6 : vector<16x128xf32>
    %8 = arith.truncf %7 : vector<16x128xf32> to vector<16x128xbf16>
    %c0_6 = arith.constant 0 : index
    %c0_7 = arith.constant 0 : index
    %9 = vector.load %arg4[%c0_6, %c0_7] : memref<128x128xbf16, #tpu.memory_space<vmem>>, vector<128x128xbf16>
    %cst_8 = arith.constant dense<0.000000e+00> : vector<16x128xf32>
    %10 = tpu.matmul %8, %9, %cst_8 {dimension_numbers = #tpu.dot_dimension_numbers<[1], [0], [0], [1], [0, 0, 1, 1], [], []>} : vector<16x128xbf16>, vector<128x128xbf16>, vector<16x128xf32> -> vector<16x128xf32>
    %c0_9 = arith.constant 0 : index
    %c0_10 = arith.constant 0 : index
    %11 = vector.load %arg5[%c0_9, %c0_10] : memref<1x128xf32, #tpu.memory_space<vmem>>, vector<1x128xf32>
    %12 = vector.broadcast %11 : vector<1x128xf32> to vector<16x128xf32>
    %13 = arith.addf %10, %12 : vector<16x128xf32>
    %cst_11 = arith.constant 0.000000e+00 : f32
    %14 = vector.broadcast %cst_11 : f32 to vector<16x128xf32>
    %15 = arith.maximumf %13, %14 : vector<16x128xf32>
    %16 = arith.truncf %15 : vector<16x128xf32> to vector<16x128xbf16>
    %c0_12 = arith.constant 0 : index
    %c0_13 = arith.constant 0 : index
    %17 = vector.load %arg6[%c0_12, %c0_13] : memref<128x128xbf16, #tpu.memory_space<vmem>>, vector<128x128xbf16>
    %cst_14 = arith.constant dense<0.000000e+00> : vector<16x128xf32>
    %18 = tpu.matmul %16, %17, %cst_14 {dimension_numbers = #tpu.dot_dimension_numbers<[1], [0], [0], [1], [0, 0, 1, 1], [], []>} : vector<16x128xbf16>, vector<128x128xbf16>, vector<16x128xf32> -> vector<16x128xf32>
    %c0_15 = arith.constant 0 : index
    %c0_16 = arith.constant 0 : index
    %19 = vector.load %arg7[%c0_15, %c0_16] : memref<1x128xf32, #tpu.memory_space<vmem>>, vector<1x128xf32>
    %20 = vector.broadcast %19 : vector<1x128xf32> to vector<16x128xf32>
    %21 = arith.addf %18, %20 : vector<16x128xf32>
    %cst_17 = arith.constant 0.000000e+00 : f32
    %22 = vector.broadcast %cst_17 : f32 to vector<16x128xf32>
    %23 = arith.maximumf %21, %22 : vector<16x128xf32>
    %24 = arith.truncf %23 : vector<16x128xf32> to vector<16x128xbf16>
    %c0_18 = arith.constant 0 : index
    %c0_19 = arith.constant 0 : index
    %25 = vector.load %arg8[%c0_18, %c0_19] : memref<128x2xbf16, #tpu.memory_space<vmem>>, vector<128x2xbf16>
    %cst_20 = arith.constant dense<0.000000e+00> : vector<16x2xf32>
    %26 = tpu.matmul %24, %25, %cst_20 {dimension_numbers = #tpu.dot_dimension_numbers<[1], [0], [0], [1], [0, 0, 1, 1], [], []>} : vector<16x128xbf16>, vector<128x2xbf16>, vector<16x2xf32> -> vector<16x2xf32>
    %c0_21 = arith.constant 0 : index
    %c0_22 = arith.constant 0 : index
    %27 = vector.load %arg9[%c0_21, %c0_22] : memref<1x2xf32, #tpu.memory_space<vmem>>, vector<1x2xf32>
    %28 = vector.broadcast %27 : vector<1x2xf32> to vector<16x2xf32>
    %29 = arith.addf %26, %28 : vector<16x2xf32>
    %c0_23 = arith.constant 0 : index
    %c0_24 = arith.constant 0 : index
    %30 = vector.load %arg10[%c0_23, %c0_24] : memref<16x2xf32, #tpu.memory_space<vmem>>, vector<16x2xf32>
    tpu.vector_store %arg10[%c0_23, %c0_24], %29 {strides = array<i32>} : memref<16x2xf32, #tpu.memory_space<vmem>>, vector<16x2xf32>,
    return
  }
  func.func @transform_0(%arg0: i32) -> (i32, i32) {
    %c0_i32 = arith.constant 0 : i32
    %c0_i32_0 = arith.constant 0 : i32
    return %arg0, %c0_i32 : i32, i32
  }
  func.func @transform_1(%arg0: i32) -> (i32, i32) {
    %c0_i32 = arith.constant 0 : i32
    %c0_i32_0 = arith.constant 0 : i32
    %c0_i32_1 = arith.constant 0 : i32
    return %c0_i32, %c0_i32_0 : i32, i32
  }
  func.func @transform_2(%arg0: i32) -> (i32, i32) {
    %c0_i32 = arith.constant 0 : i32
    %c0_i32_0 = arith.constant 0 : i32
    %c0_i32_1 = arith.constant 0 : i32
    return %c0_i32, %c0_i32_0 : i32, i32
  }
  func.func @transform_3(%arg0: i32) -> (i32, i32) {
    %c0_i32 = arith.constant 0 : i32
    %c0_i32_0 = arith.constant 0 : i32
    %c0_i32_1 = arith.constant 0 : i32
    return %c0_i32, %c0_i32_0 : i32, i32
  }
  func.func @transform_4(%arg0: i32) -> (i32, i32) {
    %c0_i32 = arith.constant 0 : i32
    %c0_i32_0 = arith.constant 0 : i32
    %c0_i32_1 = arith.constant 0 : i32
    return %c0_i32, %c0_i32_0 : i32, i32
  }
  func.func @transform_5(%arg0: i32) -> (i32, i32) {
    %c0_i32 = arith.constant 0 : i32
    %c0_i32_0 = arith.constant 0 : i32
    %c0_i32_1 = arith.constant 0 : i32
    return %c0_i32, %c0_i32_0 : i32, i32
  }
  func.func @transform_6(%arg0: i32) -> (i32, i32) {
    %c0_i32 = arith.constant 0 : i32
    %c0_i32_0 = arith.constant 0 : i32
    %c0_i32_1 = arith.constant 0 : i32
    return %c0_i32, %c0_i32_0 : i32, i32
  }
  func.func @transform_7(%arg0: i32) -> (i32, i32) {
    %c0_i32 = arith.constant 0 : i32
    %c0_i32_0 = arith.constant 0 : i32
    %c0_i32_1 = arith.constant 0 : i32
    return %c0_i32, %c0_i32_0 : i32, i32
  }
  func.func @transform_8(%arg0: i32) -> (i32, i32) {
    %c0_i32 = arith.constant 0 : i32
    %c0_i32_0 = arith.constant 0 : i32
    %c0_i32_1 = arith.constant 0 : i32
    return %c0_i32, %c0_i32_0 : i32, i32
  }
  func.func @transform_9(%arg0: i32) -> (i32, i32) {
    %c0_i32 = arith.constant 0 : i32
    %c0_i32_0 = arith.constant 0 : i32
    return %arg0, %c0_i32 : i32, i32
  }
}

</mosaic_0001>

<llo_original>
// kernel: dqn_simple_forward.1
$region0: #{dqn_simple_forward.1}
  #allocation0 [shape = 'u32[]', space=smem, size = 0x4, offset = 0x4, fixed_abs, tag = 'smem constant byte address 0x4 - core index']
  #allocation1 [shape = 'u32[144,128]{1,0:T(1,128)}', space=vmem, size = 0x12000, scoped, tag = 'internal scratch']
  %s0 = inlined_call_operand.vmem [shape: bf16[16,10], index: 0, kind: input, shape index: {}]
  %s1 = inlined_call_operand.vmem [shape: bf16[10,128], index: 1, kind: input, shape index: {}]
  %s2 = inlined_call_operand.hbm [shape: f32[1,128], index: 2, kind: input, shape index: {}]
  %s3 = inlined_call_operand.vmem [shape: bf16[128,128], index: 3, kind: input, shape index: {}]
  %s4 = inlined_call_operand.hbm [shape: f32[1,128], index: 4, kind: input, shape index: {}]
  %s5 = inlined_call_operand.vmem [shape: bf16[128,128], index: 5, kind: input, shape index: {}]
  %s6 = inlined_call_operand.hbm [shape: f32[1,128], index: 6, kind: input, shape index: {}]
  %s7 = inlined_call_operand.vmem [shape: bf16[128,2], index: 7, kind: input, shape index: {}]
  %s8 = inlined_call_operand.hbm [shape: f32[1,2], index: 8, kind: input, shape index: {}]
  %s9 = inlined_call_operand.vmem [shape: f32[16,2], index: 9, kind: output, shape index: {}]
  %s10 = sld [smem:[#allocation0]]
  $region62: #{dqn_simple_forward.1} parent=0
    _
  %s12 = ssub.s32 1, %s10
  %s13 = scalar_select 0, %s12, %s10
  $region1: #{dqn_simple_forward.1} parent=0
    #allocation2 [shape = 'u8[512]{0}', space=vmem, size = 0x400, scoped, tag = 'input window, operand 2, single buffered']
    #allocation3 [shape = 's32[1]{0}', space=sflag, size = 0x4, scoped, tag = 'scoped memory for dqn_simple_forward.1']
    #allocation4 [shape = 'u8[512]{0}', space=vmem, size = 0x400, scoped, tag = 'input window, operand 4, single buffered']
    #allocation5 [shape = 's32[1]{0}', space=sflag, size = 0x4, scoped, tag = 'scoped memory for dqn_simple_forward.1']
    #allocation6 [shape = 'u8[512]{0}', space=vmem, size = 0x400, scoped, tag = 'input window, operand 6, single buffered']
    #allocation7 [shape = 'u8[512]{0}', space=vmem, size = 0x400, scoped, tag = 'input window, operand 8, single buffered']
    #allocation8 [shape = 's32[1]{0}', space=sflag, size = 0x4, scoped, tag = 'scoped memory for dqn_simple_forward.1']
    %14 = vsyncpa [#allocation3], 0
    %15 = vsyncpa [#allocation5], 0
    %16 = vsyncpa [#allocation8], 0
    // Predicated region
    $region2: #{dqn_simple_forward.1} parent=1 // pred_check
      _
    $region3: #{dqn_simple_forward.1} parent=1 // pred_check_branch
      %18 = sbr.rel (0) target = $region5
    $region4: #{dqn_simple_forward.1} parent=1 // pred_region
      _
    $region5: #{dqn_simple_forward.1} parent=1 // pred_fallthru
      _
    // Predicated region
    $region6: #{dqn_simple_forward.1} parent=1 // pred_check
      _
    $region7: #{dqn_simple_forward.1} parent=1 // pred_check_branch
      %20 = sbr.rel (0) target = $region9
    $region8: #{dqn_simple_forward.1} parent=1 // pred_region
      _
    $region9: #{dqn_simple_forward.1} parent=1 // pred_fallthru
      _
    // Predicated region
    $region10: #{dqn_simple_forward.1} parent=1 // pred_check
      _
    $region11: #{dqn_simple_forward.1} parent=1 // pred_check_branch
      %22 = sbr.rel (0) target = $region13
    $region12: #{dqn_simple_forward.1} parent=1 // pred_region
      %s24 = ssub.s32 16, 16
      %25 = vsyncadd [#allocation3], %s24
      %s27 = sshll.u32 [#allocation2], 4
      %s28 = int_to_ptr.vmem [resolvable:$true] %s27
      %30 = dma.hbm_to_vmem [thread:$0]  %s2, 16, %s28, [#allocation3]
    $region13: #{dqn_simple_forward.1} parent=1 // pred_fallthru
      _
    // Predicated region
    $region14: #{dqn_simple_forward.1} parent=1 // pred_check
      _
    $region15: #{dqn_simple_forward.1} parent=1 // pred_check_branch
      %32 = sbr.rel (0) target = $region17
    $region16: #{dqn_simple_forward.1} parent=1 // pred_region
      _
    $region17: #{dqn_simple_forward.1} parent=1 // pred_fallthru
      _
    // Predicated region
    $region18: #{dqn_simple_forward.1} parent=1 // pred_check
      _
    $region19: #{dqn_simple_forward.1} parent=1 // pred_check_branch
      %34 = sbr.rel (0) target = $region21
    $region20: #{dqn_simple_forward.1} parent=1 // pred_region
      %s36 = ssub.s32 16, 16
      %37 = vsyncadd [#allocation5], %s36
      %s39 = sshll.u32 [#allocation4], 4
      %s40 = int_to_ptr.vmem [resolvable:$true] %s39
      %42 = dma.hbm_to_vmem [thread:$0]  %s4, 16, %s40, [#allocation5]
    $region21: #{dqn_simple_forward.1} parent=1 // pred_fallthru
      _
    // Predicated region
    $region22: #{dqn_simple_forward.1} parent=1 // pred_check
      _
    $region23: #{dqn_simple_forward.1} parent=1 // pred_check_branch
      %44 = sbr.rel (0) target = $region25
    $region24: #{dqn_simple_forward.1} parent=1 // pred_region
      _
    $region25: #{dqn_simple_forward.1} parent=1 // pred_fallthru
      _
    // Predicated region
    $region26: #{dqn_simple_forward.1} parent=1 // pred_check
      _
    $region27: #{dqn_simple_forward.1} parent=1 // pred_check_branch
      %46 = sbr.rel (0) target = $region29
    $region28: #{dqn_simple_forward.1} parent=1 // pred_region
      %s48 = ssub.s32 16, 16
      %49 = vsyncadd [#allocation5], %s48
      %s51 = sshll.u32 [#allocation6], 4
      %s52 = int_to_ptr.vmem [resolvable:$true] %s51
      %54 = dma.hbm_to_vmem [thread:$0]  %s6, 16, %s52, [#allocation5]
    $region29: #{dqn_simple_forward.1} parent=1 // pred_fallthru
      _
    // Predicated region
    $region30: #{dqn_simple_forward.1} parent=1 // pred_check
      _
    $region31: #{dqn_simple_forward.1} parent=1 // pred_check_branch
      %56 = sbr.rel (0) target = $region33
    $region32: #{dqn_simple_forward.1} parent=1 // pred_region
      _
    $region33: #{dqn_simple_forward.1} parent=1 // pred_fallthru
      _
    // Predicated region
    $region34: #{dqn_simple_forward.1} parent=1 // pred_check
      _
    $region35: #{dqn_simple_forward.1} parent=1 // pred_check_branch
      %58 = sbr.rel (0) target = $region37
    $region36: #{dqn_simple_forward.1} parent=1 // pred_region
      %s60 = ssub.s32 16, 16
      %61 = vsyncadd [#allocation8], %s60
      %s63 = sshll.u32 [#allocation7], 4
      %s64 = int_to_ptr.vmem [resolvable:$true] %s63
      %66 = dma.hbm_to_vmem [thread:$0]  %s8, 16, %s64, [#allocation8]
    $region37: #{dqn_simple_forward.1} parent=1 // pred_fallthru
      _
    // Predicated region
    $region38: #{dqn_simple_forward.1} parent=1 // pred_check
      _
    $region39: #{dqn_simple_forward.1} parent=1 // pred_check_branch
      %68 = sbr.rel (0) target = $region41
    $region40: #{dqn_simple_forward.1} parent=1 // pred_region
      %69 = dma.done [#allocation3], 16
    $region41: #{dqn_simple_forward.1} parent=1 // pred_fallthru
      _
    // Predicated region
    $region42: #{dqn_simple_forward.1} parent=1 // pred_check
      _
    $region43: #{dqn_simple_forward.1} parent=1 // pred_check_branch
      %71 = sbr.rel (0) target = $region45
    $region44: #{dqn_simple_forward.1} parent=1 // pred_region
      %72 = dma.done [#allocation5], 16
    $region45: #{dqn_simple_forward.1} parent=1 // pred_fallthru
      _
    // Predicated region
    $region46: #{dqn_simple_forward.1} parent=1 // pred_check
      _
    $region47: #{dqn_simple_forward.1} parent=1 // pred_check_branch
      %74 = sbr.rel (0) target = $region49
    $region48: #{dqn_simple_forward.1} parent=1 // pred_region
      %75 = dma.done [#allocation5], 16
    $region49: #{dqn_simple_forward.1} parent=1 // pred_fallthru
      _
    // Predicated region
    $region50: #{dqn_simple_forward.1} parent=1 // pred_check
      _
    $region51: #{dqn_simple_forward.1} parent=1 // pred_check_branch
      %77 = sbr.rel (0) target = $region53
    $region52: #{dqn_simple_forward.1} parent=1 // pred_region
      %78 = dma.done [#allocation8], 16
    $region53: #{dqn_simple_forward.1} parent=1 // pred_fallthru
      _
    %v80 = vld [vmem:[%s0] sm:$0xf]
    %v81 = vld [vmem:[%s0 + $0x4] sm:$0xf]
    %v82 = vld [vmem:[%s1] sm:$0xf]
    %v83 = vld [vmem:[%s1 + $0x4] sm:$0x1]
    %v84 = vld [vmem:[#allocation2] sm:$0x1]
    %v86 = vlaneseq
    %v87 = vshrl.u32 %v86, 7
    %v88 = vsub.s32 0, %v87
    %v89 = vrot.slane %v84, %v88
    %v93 = vunpack.c.l.b16 %v80
    %v94 = vunpack.c.l.b16 %v81
    %v95 = vpack.c.b16 %v94, %v93
    %v98 = vunpack.c.l.b16 %v82
    %v99 = vunpack.c.l.b16 %v83
    %v100 = vpack.c.b16 %v99, %v98
    %vm101 = vcmask 80896
    %v103 = vsel %vm101, %v95, 0
    %vm105 = vcmask 1044480
    %v107 = vsel %vm105, %v100, 0
    %109 = vmatprep.subr.bf16.mxu0 0
    %110 = vmatpush1.bf16.msra.mxu0 %v107
    %111 = vmatprep.subr.bf16.mxu0 0
    %112 = vmatpush1.bf16.msra.mxu0 0
    %113 = vmatprep.subr.bf16.mxu0 0
    %114 = vmatpush1.bf16.msra.mxu0 0
    %115 = vmatprep.subr.bf16.mxu0 0
    %116 = vmatpush1.bf16.msra.mxu0 0
    %117 = vmatprep.subr.bf16.mxu0 0
    %118 = vmatpush1.bf16.msra.mxu0 0
    %119 = vmatprep.subr.bf16.mxu0 0
    %120 = vmatpush1.bf16.msra.mxu0 0
    %121 = vmatprep.subr.bf16.mxu0 0
    %122 = vmatpush1.bf16.msra.mxu0 0
    %123 = vmatprep.subr.bf16.mxu0 0
    %124 = vmatpush1.bf16.msra.mxu0 0
    %125 = vmatprep.subr.bf16.mxu0 0
    %126 = vmatpush1.bf16.msra.mxu0 0
    %127 = vmatprep.subr.bf16.mxu0 0
    %128 = vmatpush1.bf16.msra.mxu0 0
    %129 = vmatprep.subr.bf16.mxu0 0
    %130 = vmatpush1.bf16.msra.mxu0 0
    %131 = vmatprep.subr.bf16.mxu0 0
    %132 = vmatpush1.bf16.msra.mxu0 0
    %133 = vmatprep.subr.bf16.mxu0 0
    %134 = vmatpush1.bf16.msra.mxu0 0
    %135 = vmatprep.subr.bf16.mxu0 0
    %136 = vmatpush1.bf16.msra.mxu0 0
    %137 = vmatprep.subr.bf16.mxu0 0
    %138 = vmatpush1.bf16.msra.mxu0 0
    %139 = vmatprep.subr.bf16.mxu0 0
    %140 = vmatpush1.bf16.msra.mxu0 0
    %141 = vmatprep.mubr.bf16.mxu0 0
    %142 = vmatmul.mubr.bf16.gmra.mrb[0].mxu0 %v103
    %v143 = vpop.f32.mrb[0].mxu0
    %v144 = vadd.f32 %v89, %v143
    %v145 = vpop.f32.mrb[0].mxu0
    %v146 = vpop.f32.mrb[0].mxu0
    %v147 = vadd.f32 %v89, %v146
    %v148 = vpop.f32.mrb[0].mxu0
    %149 = vdwg.mxu0
    %v150 = vmax.f32 %v144, 0.0
    %v151 = vmax.f32 %v147, 0.0
    %v152 = vpack.c.bf16 %v151, %v150
    %v153 = vld [vmem:[%s3] sm:$0xf]
    %v154 = vld [vmem:[%s3 + $0x4] sm:$0xf]
    %v155 = vld [vmem:[%s3 + $0x8] sm:$0xf]
    %v156 = vld [vmem:[%s3 + $0xc] sm:$0xf]
    %v157 = vld [vmem:[%s3 + $0x10] sm:$0xf]
    %v158 = vld [vmem:[%s3 + $0x14] sm:$0xf]
    %v159 = vld [vmem:[%s3 + $0x18] sm:$0xf]
    %v160 = vld [vmem:[%s3 + $0x1c] sm:$0xf]
    %v161 = vld [vmem:[%s3 + $0x20] sm:$0xf]
    %v162 = vld [vmem:[%s3 + $0x24] sm:$0xf]
    %v163 = vld [vmem:[%s3 + $0x28] sm:$0xf]
    %v164 = vld [vmem:[%s3 + $0x2c] sm:$0xf]
    %v165 = vld [vmem:[%s3 + $0x30] sm:$0xf]
    %v166 = vld [vmem:[%s3 + $0x34] sm:$0xf]
    %v167 = vld [vmem:[%s3 + $0x38] sm:$0xf]
    %v168 = vld [vmem:[%s3 + $0x3c] sm:$0xf]
    %v169 = vld [vmem:[#allocation4] sm:$0x1]
    %v171 = vlaneseq
    %v172 = vshrl.u32 %v171, 7
    %v173 = vsub.s32 0, %v172
    %v174 = vrot.slane %v169, %v173
    %v192 = vunpack.c.l.b16 %v153
    %v193 = vunpack.c.l.b16 %v154
    %v194 = vunpack.c.l.b16 %v155
    %v195 = vunpack.c.l.b16 %v156
    %v196 = vunpack.c.l.b16 %v157
    %v197 = vunpack.c.l.b16 %v158
    %v198 = vunpack.c.l.b16 %v159
    %v199 = vunpack.c.l.b16 %v160
    %v200 = vunpack.c.l.b16 %v161
    %v201 = vunpack.c.l.b16 %v162
    %v202 = vunpack.c.l.b16 %v163
    %v203 = vunpack.c.l.b16 %v164
    %v204 = vunpack.c.l.b16 %v165
    %v205 = vunpack.c.l.b16 %v166
    %v206 = vunpack.c.l.b16 %v167
    %v207 = vunpack.c.l.b16 %v168
    %v208 = vpack.c.b16 %v193, %v192
    %v209 = vpack.c.b16 %v195, %v194
    %v210 = vpack.c.b16 %v197, %v196
    %v211 = vpack.c.b16 %v199, %v198
    %v212 = vpack.c.b16 %v201, %v200
    %v213 = vpack.c.b16 %v203, %v202
    %v214 = vpack.c.b16 %v205, %v204
    %v215 = vpack.c.b16 %v207, %v206
    %224 = vmatprep.subr.bf16.mxu0 0
    %225 = vmatpush1.bf16.msra.mxu0 %v208
    %226 = vmatprep.subr.bf16.mxu0 0
    %227 = vmatpush1.bf16.msra.mxu0 %v209
    %228 = vmatprep.subr.bf16.mxu0 0
    %229 = vmatpush1.bf16.msra.mxu0 %v210
    %230 = vmatprep.subr.bf16.mxu0 0
    %231 = vmatpush1.bf16.msra.mxu0 %v211
    %232 = vmatprep.subr.bf16.mxu0 0
    %233 = vmatpush1.bf16.msra.mxu0 %v212
    %234 = vmatprep.subr.bf16.mxu0 0
    %235 = vmatpush1.bf16.msra.mxu0 %v213
    %236 = vmatprep.subr.bf16.mxu0 0
    %237 = vmatpush1.bf16.msra.mxu0 %v214
    %238 = vmatprep.subr.bf16.mxu0 0
    %239 = vmatpush1.bf16.msra.mxu0 %v215
    %240 = vmatprep.subr.bf16.mxu0 0
    %241 = vmatpush1.bf16.msra.mxu0 0
    %242 = vmatprep.subr.bf16.mxu0 0
    %243 = vmatpush1.bf16.msra.mxu0 0
    %244 = vmatprep.subr.bf16.mxu0 0
    %245 = vmatpush1.bf16.msra.mxu0 0
    %246 = vmatprep.subr.bf16.mxu0 0
    %247 = vmatpush1.bf16.msra.mxu0 0
    %248 = vmatprep.subr.bf16.mxu0 0
    %249 = vmatpush1.bf16.msra.mxu0 0
    %250 = vmatprep.subr.bf16.mxu0 0
    %251 = vmatpush1.bf16.msra.mxu0 0
    %252 = vmatprep.subr.bf16.mxu0 0
    %253 = vmatpush1.bf16.msra.mxu0 0
    %254 = vmatprep.subr.bf16.mxu0 0
    %255 = vmatpush1.bf16.msra.mxu0 0
    %256 = vmatprep.mubr.bf16.mxu0 0
    %257 = vmatmul.mubr.bf16.gmra.mrb[0].mxu0 %v152
    %v258 = vpop.f32.mrb[0].mxu0
    %v259 = vadd.f32 %v174, %v258
    %v260 = vpop.f32.mrb[0].mxu0
    %v261 = vpop.f32.mrb[0].mxu0
    %v262 = vadd.f32 %v174, %v261
    %v263 = vpop.f32.mrb[0].mxu0
    %264 = vdwg.mxu0
    %v265 = vmax.f32 %v259, 0.0
    %v266 = vmax.f32 %v262, 0.0
    %v267 = vpack.c.bf16 %v266, %v265
    %v268 = vld [vmem:[%s5] sm:$0xf]
    %v269 = vld [vmem:[%s5 + $0x4] sm:$0xf]
    %v270 = vld [vmem:[%s5 + $0x8] sm:$0xf]
    %v271 = vld [vmem:[%s5 + $0xc] sm:$0xf]
    %v272 = vld [vmem:[%s5 + $0x10] sm:$0xf]
    %v273 = vld [vmem:[%s5 + $0x14] sm:$0xf]
    %v274 = vld [vmem:[%s5 + $0x18] sm:$0xf]
    %v275 = vld [vmem:[%s5 + $0x1c] sm:$0xf]
    %v276 = vld [vmem:[%s5 + $0x20] sm:$0xf]
    %v277 = vld [vmem:[%s5 + $0x24] sm:$0xf]
    %v278 = vld [vmem:[%s5 + $0x28] sm:$0xf]
    %v279 = vld [vmem:[%s5 + $0x2c] sm:$0xf]
    %v280 = vld [vmem:[%s5 + $0x30] sm:$0xf]
    %v281 = vld [vmem:[%s5 + $0x34] sm:$0xf]
    %v282 = vld [vmem:[%s5 + $0x38] sm:$0xf]
    %v283 = vld [vmem:[%s5 + $0x3c] sm:$0xf]
    %v284 = vld [vmem:[#allocation6] sm:$0x1]
    %v286 = vlaneseq
    %v287 = vshrl.u32 %v286, 7
    %v288 = vsub.s32 0, %v287
    %v289 = vrot.slane %v284, %v288
    %v307 = vunpack.c.l.b16 %v268
    %v308 = vunpack.c.l.b16 %v269
    %v309 = vunpack.c.l.b16 %v270
    %v310 = vunpack.c.l.b16 %v271
    %v311 = vunpack.c.l.b16 %v272
    %v312 = vunpack.c.l.b16 %v273
    %v313 = vunpack.c.l.b16 %v274
    %v314 = vunpack.c.l.b16 %v275
    %v315 = vunpack.c.l.b16 %v276
    %v316 = vunpack.c.l.b16 %v277
    %v317 = vunpack.c.l.b16 %v278
    %v318 = vunpack.c.l.b16 %v279
    %v319 = vunpack.c.l.b16 %v280
    %v320 = vunpack.c.l.b16 %v281
    %v321 = vunpack.c.l.b16 %v282
    %v322 = vunpack.c.l.b16 %v283
    %v323 = vpack.c.b16 %v308, %v307
    %v324 = vpack.c.b16 %v310, %v309
    %v325 = vpack.c.b16 %v312, %v311
    %v326 = vpack.c.b16 %v314, %v313
    %v327 = vpack.c.b16 %v316, %v315
    %v328 = vpack.c.b16 %v318, %v317
    %v329 = vpack.c.b16 %v320, %v319
    %v330 = vpack.c.b16 %v322, %v321
    %339 = vmatprep.subr.bf16.mxu0 0
    %340 = vmatpush1.bf16.msra.mxu0 %v323
    %341 = vmatprep.subr.bf16.mxu0 0
    %342 = vmatpush1.bf16.msra.mxu0 %v324
    %343 = vmatprep.subr.bf16.mxu0 0
    %344 = vmatpush1.bf16.msra.mxu0 %v325
    %345 = vmatprep.subr.bf16.mxu0 0
    %346 = vmatpush1.bf16.msra.mxu0 %v326
    %347 = vmatprep.subr.bf16.mxu0 0
    %348 = vmatpush1.bf16.msra.mxu0 %v327
    %349 = vmatprep.subr.bf16.mxu0 0
    %350 = vmatpush1.bf16.msra.mxu0 %v328
    %351 = vmatprep.subr.bf16.mxu0 0
    %352 = vmatpush1.bf16.msra.mxu0 %v329
    %353 = vmatprep.subr.bf16.mxu0 0
    %354 = vmatpush1.bf16.msra.mxu0 %v330
    %355 = vmatprep.subr.bf16.mxu0 0
    %356 = vmatpush1.bf16.msra.mxu0 0
    %357 = vmatprep.subr.bf16.mxu0 0
    %358 = vmatpush1.bf16.msra.mxu0 0
    %359 = vmatprep.subr.bf16.mxu0 0
    %360 = vmatpush1.bf16.msra.mxu0 0
    %361 = vmatprep.subr.bf16.mxu0 0
    %362 = vmatpush1.bf16.msra.mxu0 0
    %363 = vmatprep.subr.bf16.mxu0 0
    %364 = vmatpush1.bf16.msra.mxu0 0
    %365 = vmatprep.subr.bf16.mxu0 0
    %366 = vmatpush1.bf16.msra.mxu0 0
    %367 = vmatprep.subr.bf16.mxu0 0
    %368 = vmatpush1.bf16.msra.mxu0 0
    %369 = vmatprep.subr.bf16.mxu0 0
    %370 = vmatpush1.bf16.msra.mxu0 0
    %371 = vmatprep.mubr.bf16.mxu0 0
    %372 = vmatmul.mubr.bf16.gmra.mrb[0].mxu0 %v267
    %v373 = vpop.f32.mrb[0].mxu0
    %v374 = vadd.f32 %v289, %v373
    %v375 = vpop.f32.mrb[0].mxu0
    %v376 = vpop.f32.mrb[0].mxu0
    %v377 = vadd.f32 %v289, %v376
    %v378 = vpop.f32.mrb[0].mxu0
    %379 = vdwg.mxu0
    %v380 = vmax.f32 %v374, 0.0
    %v381 = vmax.f32 %v377, 0.0
    %v382 = vpack.c.bf16 %v381, %v380
    %v383 = vld [vmem:[%s7] sm:$0xf]
    %v384 = vld [vmem:[%s7 + $0x4] sm:$0xf]
    %v385 = vld [vmem:[%s7 + $0x8] sm:$0xf]
    %v386 = vld [vmem:[%s7 + $0xc] sm:$0xf]
    %v387 = vld [vmem:[%s7 + $0x10] sm:$0xf]
    %v388 = vld [vmem:[%s7 + $0x14] sm:$0xf]
    %v389 = vld [vmem:[%s7 + $0x18] sm:$0xf]
    %v390 = vld [vmem:[%s7 + $0x1c] sm:$0xf]
    %v391 = vld [vmem:[%s7 + $0x20] sm:$0xf]
    %v392 = vld [vmem:[%s7 + $0x24] sm:$0xf]
    %v393 = vld [vmem:[%s7 + $0x28] sm:$0xf]
    %v394 = vld [vmem:[%s7 + $0x2c] sm:$0xf]
    %v395 = vld [vmem:[%s7 + $0x30] sm:$0xf]
    %v396 = vld [vmem:[%s7 + $0x34] sm:$0xf]
    %v397 = vld [vmem:[%s7 + $0x38] sm:$0xf]
    %v398 = vld [vmem:[%s7 + $0x3c] sm:$0xf]
    %v399 = vld [vmem:[#allocation7] sm:$0x1]
    %v401 = vlaneseq
    %v402 = vshrl.u32 %v401, 7
    %v403 = vsub.s32 0, %v402
    %v404 = vrot.slane %v399, %v403
    %v422 = vunpack.c.l.b16 %v383
    %v423 = vunpack.c.l.b16 %v384
    %v424 = vunpack.c.l.b16 %v385
    %v425 = vunpack.c.l.b16 %v386
    %v426 = vunpack.c.l.b16 %v387
    %v427 = vunpack.c.l.b16 %v388
    %v428 = vunpack.c.l.b16 %v389
    %v429 = vunpack.c.l.b16 %v390
    %v430 = vunpack.c.l.b16 %v391
    %v431 = vunpack.c.l.b16 %v392
    %v432 = vunpack.c.l.b16 %v393
    %v433 = vunpack.c.l.b16 %v394
    %v434 = vunpack.c.l.b16 %v395
    %v435 = vunpack.c.l.b16 %v396
    %v436 = vunpack.c.l.b16 %v397
    %v437 = vunpack.c.l.b16 %v398
    %v438 = vpack.c.b16 %v423, %v422
    %v439 = vpack.c.b16 %v425, %v424
    %v440 = vpack.c.b16 %v427, %v426
    %v441 = vpack.c.b16 %v429, %v428
    %v442 = vpack.c.b16 %v431, %v430
    %v443 = vpack.c.b16 %v433, %v432
    %v444 = vpack.c.b16 %v435, %v434
    %v445 = vpack.c.b16 %v437, %v436
    %454 = vmatprep.subr.bf16.mxu0 0
    %455 = vmatpush1.bf16.msra.mxu0 %v438
    %456 = vmatprep.subr.bf16.mxu0 0
    %457 = vmatpush1.bf16.msra.mxu0 %v439
    %458 = vmatprep.subr.bf16.mxu0 0
    %459 = vmatpush1.bf16.msra.mxu0 %v440
    %460 = vmatprep.subr.bf16.mxu0 0
    %461 = vmatpush1.bf16.msra.mxu0 %v441
    %462 = vmatprep.subr.bf16.mxu0 0
    %463 = vmatpush1.bf16.msra.mxu0 %v442
    %464 = vmatprep.subr.bf16.mxu0 0
    %465 = vmatpush1.bf16.msra.mxu0 %v443
    %466 = vmatprep.subr.bf16.mxu0 0
    %467 = vmatpush1.bf16.msra.mxu0 %v444
    %468 = vmatprep.subr.bf16.mxu0 0
    %469 = vmatpush1.bf16.msra.mxu0 %v445
    %470 = vmatprep.subr.bf16.mxu0 0
    %471 = vmatpush1.bf16.msra.mxu0 0
    %472 = vmatprep.subr.bf16.mxu0 0
    %473 = vmatpush1.bf16.msra.mxu0 0
    %474 = vmatprep.subr.bf16.mxu0 0
    %475 = vmatpush1.bf16.msra.mxu0 0
    %476 = vmatprep.subr.bf16.mxu0 0
    %477 = vmatpush1.bf16.msra.mxu0 0
    %478 = vmatprep.subr.bf16.mxu0 0
    %479 = vmatpush1.bf16.msra.mxu0 0
    %480 = vmatprep.subr.bf16.mxu0 0
    %481 = vmatpush1.bf16.msra.mxu0 0
    %482 = vmatprep.subr.bf16.mxu0 0
    %483 = vmatpush1.bf16.msra.mxu0 0
    %484 = vmatprep.subr.bf16.mxu0 0
    %485 = vmatpush1.bf16.msra.mxu0 0
    %486 = vmatprep.mubr.bf16.mxu0 0
    %487 = vmatmul.mubr.bf16.gmra.mrb[0].mxu0 %v382
    %v488 = vpop.f32.mrb[0].mxu0
    %v489 = vadd.f32 %v404, %v488
    %v490 = vpop.f32.mrb[0].mxu0
    %v491 = vpop.f32.mrb[0].mxu0
    %v492 = vadd.f32 %v404, %v491
    %v493 = vpop.f32.mrb[0].mxu0
    %494 = vdwg.mxu0
    %vm495 = vcmask 15360
    %496 = vst.msk [vmem:[%s9] sm:$0xff] %vm495, %v489
    %497 = vst.msk [vmem:[%s9 + $0x8] sm:$0xff] %vm495, %v492
    // Predicated region
    $region54: #{dqn_simple_forward.1} parent=1 // pred_check
      _
    $region55: #{dqn_simple_forward.1} parent=1 // pred_check_branch
      %499 = sbr.rel (0) target = $region57
    $region56: #{dqn_simple_forward.1} parent=1 // pred_region
      _
    $region57: #{dqn_simple_forward.1} parent=1 // pred_fallthru
      _
    // Predicated region
    $region58: #{dqn_simple_forward.1} parent=1 // pred_check
      _
    $region59: #{dqn_simple_forward.1} parent=1 // pred_check_branch
      %501 = sbr.rel (0) target = $region61
    $region60: #{dqn_simple_forward.1} parent=1 // pred_region
      _
    $region61: #{dqn_simple_forward.1} parent=1 // pred_fallthru
      _
    %502 = vsyncpa [#allocation3], 1
    %503 = vsyncpa [#allocation5], 1
    %504 = vsyncpa [#allocation8], 1

</llo_original>
